<compile_context>
chip_gen: v7x
topology: tpu7x:2x2x1
jax: 0.10.0
libtpu: 0.0.40
codegen_flags: <defaults>
</compile_context>

<pallas_src>
import jax
import jax.numpy as jnp
from jax.experimental import pallas as pl
from jax.experimental.pallas import tpu as pltpu

K = 3  # kernel size (static)


def _conv3x3_kernel(x_ref, h_ref, w_ref, b_ref, o_ref, xe_ref, xg_ref, acc_ref):
    """One batch element x one H-strip.

    x_ref  : (1, C_in, TS)           strip, spatial flattened onto lanes (TS = TH*W)
    h_ref  : (1, 1, 2, C_in, W)      [row above strip, row below strip]
                                     (already zero at the image borders)
    w_ref  : (3, C_out, 3*C_in_pad)  weights, dh-group major, columns [kw*C_in_pad + ci]
    b_ref  : (C_out, 1)              bias (f32)
    o_ref  : (1, C_out, TS)
    xe_ref : VMEM (C_in_pad, TS+2W+2)  extended strip [guard | ht | strip | hb | guard]
    xg_ref : VMEM (3*C_in_pad, TS)     one dh-group of the im2col matrix
    acc_ref: VMEM (C_out, TS) f32      output accumulator
    """
    c_in = x_ref.shape[1]
    TS = x_ref.shape[2]
    W = h_ref.shape[4]
    c_in_pad = xe_ref.shape[0]
    cdtype = xe_ref.dtype

    halos = h_ref[0, 0]                      # (2, C_in, W)
    ht = halos[0].astype(cdtype)             # row above the strip (zeros at top border)
    hb = halos[1].astype(cdtype)             # row below the strip (zeros at bottom border)
    xs = x_ref[0].astype(cdtype)             # (C_in, TS)

    # Build the extended strip in scratch with plain ref stores (no concat).
    # Layout: [guard(1) | ht (W) | strip (TS) | hb (W) | guard(1)].  The guard
    # columns are only ever read at column-masked positions (through jnp.where),
    # so they never need initializing.
    xe_ref[0:c_in, 1:1 + W] = ht
    xe_ref[0:c_in, 1 + W:1 + W + TS] = xs
    xe_ref[0:c_in, 1 + W + TS:1 + 2 * W + TS] = hb
    if c_in_pad > c_in:
        # Zero the channel-pad rows so the matmul never sees uninitialized VMEM
        # (their weight columns are zero, but garbage could be NaN/Inf).
        xe_ref[c_in:c_in_pad, :] = jnp.zeros(
            (c_in_pad - c_in, xe_ref.shape[1]), cdtype)

    # Column (w) index of every output lane; masks implement pad=1 along W for
    # the dw = +-1 taps.
    col = jax.lax.broadcasted_iota(jnp.int32, (1, TS), 1) % W
    col_ok = {-1: col >= 1, 0: None, 1: col <= W - 2}

    use_roll = (TS % 128 == 0)

    for g, dh in enumerate((-1, 0, 1)):
        boff = 1 + (dh + 1) * W
        base = xe_ref[:, boff:boff + TS]                  # (C_in_pad, TS)
        for j, dw in enumerate((-1, 0, 1)):
            if dw == 0:
                t = base
            elif use_roll:
                # Horizontal shift on the XLU; wrapped lanes are masked below.
                t = pltpu.roll(base, shift=(-dw) % TS, axis=1)
            else:
                t = xe_ref[:, boff + dw:boff + dw + TS]
            m = col_ok[dw]
            if m is not None:
                t = jnp.where(m, t, jnp.zeros_like(t))
            # Each tap's live range ends at this aligned store (no 9-way concat).
            xg_ref[j * c_in_pad:(j + 1) * c_in_pad, :] = t

        part = jax.lax.dot_general(
            w_ref[g], xg_ref[...],
            dimension_numbers=(((1,), (0,)), ((), ())),
            preferred_element_type=jnp.float32)           # (C_out, TS)
        if g == 0:
            acc_ref[...] = part
        else:
            acc_ref[...] += part

    out = acc_ref[...] + b_ref[...].astype(jnp.float32)
    o_ref[0] = out.astype(o_ref.dtype)                    # lane-dense store (TS on lanes)


def _round_up(v, m):
    return (v + m - 1) // m * m


def _vmem_capacity_bytes():
    try:
        return int(pltpu.get_tpu_info().vmem_capacity_bytes)
    except Exception:
        return 64 * 1024 * 1024   # conservative (v7x-sized) fallback


def _pick_tile_h(H, W, c_in, c_in_pad, c_out, in_isz, c_isz, vmem_cap):
    """Largest H-strip whose real per-step working set fits a generation-aware
    budget (~VMEM/5), preferring >= 2 grid steps along H for pipelining /
    megacore sharding."""
    cands = [th for th in range(1, H + 1)
             if H % th == 0 and ((th * W) % 128 == 0 or th == H)]

    def step_bytes(th):
        ts = th * W
        xe = c_in_pad * (ts + 2 * W + 2) * c_isz               # extended strip scratch
        xg = K * c_in_pad * ts * c_isz                         # dh-group im2col scratch
        acc = c_out * ts * 4                                   # f32 accumulator
        io = 2 * c_in * ts * in_isz + 2 * c_out * ts * in_isz  # dbl-buffered strip in/out
        halo = 4 * c_in * W * in_isz                           # dbl-buffered halo block
        wres = 2 * (K * K * c_in_pad * c_out * c_isz + c_out * 4)
        return xe + xg + acc + io + halo + wres

    budget = max(vmem_cap // 5, 2 * 1024 * 1024)
    fitting = [th for th in cands if step_bytes(th) <= budget] or [min(cands)]
    multi = [th for th in fitting if H // th >= 2]
    return max(multi) if multi else max(fitting)


def conv_block_forward(x, weight, bias, *, tile_h=None, use_bf16=False):
    """ConvBlock forward: Conv2d(c_in, c_out, k=3, s=1, p=1). NCHW in / NCHW out.

    use_bf16=True runs the MXU with bf16 operands (f32 accumulate): ~2x less
    VMEM/HBM and much higher MXU rate on v6e/v7x, ~1e-3 relative error vs the
    f32 PyTorch reference.
    """
    N, C_in, H, W = x.shape
    C_out = weight.shape[0]
    S = H * W

    cdtype = jnp.bfloat16 if use_bf16 else x.dtype
    C_in_pad = _round_up(C_in, 8)
    in_isz = jnp.dtype(x.dtype).itemsize
    c_isz = jnp.dtype(cdtype).itemsize

    vmem_cap = _vmem_capacity_bytes()
    TH = (_pick_tile_h(H, W, C_in, C_in_pad, C_out, in_isz, c_isz, vmem_cap)
          if tile_h is None else tile_h)
    assert H % TH == 0 and ((TH * W) % 128 == 0 or TH == H), \
        f"tile_h={TH} must divide H and give a lane-tileable strip"
    n_strips = H // TH
    TS = TH * W

    # Free view: spatial flattened onto the lane dimension (no transpose/pad).
    x2d = x.reshape(N, C_in, S)

    # One merged halo block per strip: [row above, row below], zeros at the
    # image borders (pad=1 in H).  This is the only extra HBM traffic
    # (2/TH of the input) and it keeps every BlockSpec a plain block.
    zero_row = jnp.zeros((N, C_in, 1, W), x.dtype)
    rows_above = jnp.concatenate(
        [zero_row, x[:, :, TH - 1::TH, :][:, :, :-1, :]], axis=2)   # (N, C_in, n_strips, W)
    if n_strips > 1:
        rows_below = jnp.concatenate([x[:, :, TH::TH, :], zero_row], axis=2)
    else:
        rows_below = zero_row
    halos = jnp.stack([rows_above, rows_below], axis=2)             # (N, C_in, 2, n_strips, W)
    halos = jnp.transpose(halos, (0, 3, 2, 1, 4))                   # (N, n_strips, 2, C_in, W)

    # Weights: (C_out, C_in, 3, 3) -> (3, C_out, 3*C_in_pad), dh-group major,
    # columns ordered [kw*C_in_pad + ci]; channels zero-padded to a sublane
    # multiple so every tap block in the im2col scratch is tile-aligned.
    w = jnp.transpose(weight, (2, 3, 1, 0))                         # (kh, kw, C_in, C_out)
    if C_in_pad != C_in:
        w = jnp.pad(w, ((0, 0), (0, 0), (0, C_in_pad - C_in), (0, 0)))
    w3 = jnp.transpose(w, (0, 3, 1, 2)).reshape(K, C_out, K * C_in_pad).astype(cdtype)
    b2d = bias.reshape(C_out, 1).astype(jnp.float32)

    flops = 2 * N * S * C_out * K * K * C_in
    bytes_accessed = (N * C_in * S * in_isz                         # strips
                      + 2 * N * n_strips * C_in * W * in_isz        # halo rows
                      + int(w3.size) * c_isz + C_out * 4            # weights + bias
                      + N * C_out * S * in_isz)                     # output

    out2d = pl.pallas_call(
        _conv3x3_kernel,
        out_shape=jax.ShapeDtypeStruct((N, C_out, S), x.dtype),
        grid=(N, n_strips),
        in_specs=[
            pl.BlockSpec((1, C_in, TS), lambda b, i: (b, 0, i)),
            pl.BlockSpec((1, 1, 2, C_in, W), lambda b, i: (b, i, 0, 0, 0)),
            # Constant index maps keep weights / bias resident across all steps.
            pl.BlockSpec((K, C_out, K * C_in_pad), lambda b, i: (0, 0, 0)),
            pl.BlockSpec((C_out, 1), lambda b, i: (0, 0)),
        ],
        out_specs=pl.BlockSpec((1, C_out, TS), lambda b, i: (b, 0, i)),
        scratch_shapes=[
            pltpu.VMEM((C_in_pad, TS + 2 * W + 2), cdtype),   # extended strip
            pltpu.VMEM((K * C_in_pad, TS), cdtype),           # one dh-group im2col
            pltpu.VMEM((C_out, TS), jnp.float32),             # f32 accumulator
        ],
        compiler_params=pltpu.CompilerParams(
            dimension_semantics=("parallel", "parallel"),
            vmem_limit_bytes=min(int(vmem_cap * 4 // 5), 112 * 1024 * 1024),
        ),
        cost_estimate=pl.CostEstimate(
            flops=flops, transcendentals=0, bytes_accessed=bytes_accessed),
    )(x2d, halos, w3, b2d)

    return out2d.reshape(N, C_out, H, W)


if __name__ == "__main__":
    key = jax.random.PRNGKey(0)
    k_x, k_w, k_b = jax.random.split(key, 3)

    N, C_in, C_out, H, W = 2, 4, 8, 16, 16

    x = jax.random.normal(k_x, (N, C_in, H, W), dtype=jnp.float32)
    # Deterministic synthetic parameters (shapes match nn.Conv2d(c_in, c_out, 3)).
    weight = jax.random.normal(k_w, (C_out, C_in, K, K), dtype=jnp.float32) * 0.1
    bias = jax.random.normal(k_b, (C_out,), dtype=jnp.float32) * 0.1

    out = jax.jit(conv_block_forward)(x, weight, bias)
    out = jax.block_until_ready(out)

    # Cross-check against XLA's conv (same semantics as torch Conv2d, NCHW/OIHW).
    ref = jax.lax.conv_general_dilated(
        x, weight, window_strides=(1, 1), padding=((1, 1), (1, 1)),
        dimension_numbers=("NCHW", "OIHW", "NCHW"),
    ) + bias[None, :, None, None]
    assert out.shape == (N, C_out, H, W)
    assert jnp.allclose(out, ref, atol=1e-4, rtol=1e-4), \
        float(jnp.max(jnp.abs(out - ref)))

    print("KERNEL_OK")
</pallas_src>

<mosaic_0001>
module attributes {stable_mosaic.version = 11 : i64} {
  func.func @_conv3x3_kernel(%arg0: i32, %arg1: i32, %arg2: memref<1x4x128xf32, #tpu.memory_space<vmem>>, %arg3: memref<1x1x2x4x16xf32, #tpu.memory_space<vmem>>, %arg4: memref<3x8x24xf32, #tpu.memory_space<vmem>>, %arg5: memref<8x1xf32, #tpu.memory_space<vmem>>, %arg6: memref<1x8x128xf32, #tpu.memory_space<vmem>>, %arg7: memref<8x162xf32, #tpu.memory_space<vmem>>, %arg8: memref<24x128xf32, #tpu.memory_space<vmem>>, %arg9: memref<8x128xf32, #tpu.memory_space<vmem>>) attributes {dimension_semantics = [#tpu.dimension_semantics<parallel>, #tpu.dimension_semantics<parallel>], iteration_bounds = array<i64: 2, 2>, scalar_prefetch = 0 : i64, scratch_operands = 3 : i64, tpu.core_type = #tpu.core_type<tc>, window_params = [{transform_indices = @transform_0, window_bounds = array<i64: 1, 4, 128>}, {transform_indices = @transform_1, window_bounds = array<i64: 1, 1, 2, 4, 16>}, {pipeline_mode = #tpu.pipeline_mode<synchronous>, transform_indices = @transform_2, window_bounds = array<i64: 3, 8, 24>}, {pipeline_mode = #tpu.pipeline_mode<synchronous>, transform_indices = @transform_3, window_bounds = array<i64: 8, 1>}, {transform_indices = @transform_4, window_bounds = array<i64: 1, 8, 128>}]} {
    %c0 = arith.constant 0 : index
    %c0_0 = arith.constant 0 : index
    %c0_1 = arith.constant 0 : index
    %c0_2 = arith.constant 0 : index
    %c0_3 = arith.constant 0 : index
    %0 = vector.load %arg3[%c0, %c0_0, %c0_1, %c0_2, %c0_3] : memref<1x1x2x4x16xf32, #tpu.memory_space<vmem>>, vector<1x1x2x4x16xf32>
    %1 = vector.shape_cast %0 : vector<1x1x2x4x16xf32> to vector<2x4x16xf32>
    %2 = vector.extract_strided_slice %1 {offsets = [0, 0, 0], sizes = [1, 4, 16], strides = [1, 1, 1]} : vector<2x4x16xf32> to vector<1x4x16xf32>
    %3 = vector.shape_cast %2 : vector<1x4x16xf32> to vector<4x16xf32>
    %4 = vector.extract_strided_slice %1 {offsets = [1, 0, 0], sizes = [1, 4, 16], strides = [1, 1, 1]} : vector<2x4x16xf32> to vector<1x4x16xf32>
    %5 = vector.shape_cast %4 : vector<1x4x16xf32> to vector<4x16xf32>
    %c0_4 = arith.constant 0 : index
    %c0_5 = arith.constant 0 : index
    %c0_6 = arith.constant 0 : index
    %6 = vector.load %arg2[%c0_4, %c0_5, %c0_6] : memref<1x4x128xf32, #tpu.memory_space<vmem>>, vector<1x4x128xf32>
    %7 = vector.shape_cast %6 : vector<1x4x128xf32> to vector<4x128xf32>
    %c0_7 = arith.constant 0 : index
    %c1 = arith.constant 1 : index
    %8 = vector.load %arg7[%c0_7, %c1] : memref<8x162xf32, #tpu.memory_space<vmem>>, vector<4x16xf32>
    tpu.vector_store %arg7[%c0_7, %c1], %3 {strides = array<i32>} : memref<8x162xf32, #tpu.memory_space<vmem>>, vector<4x16xf32>,
    %c0_8 = arith.constant 0 : index
    %c17 = arith.constant 17 : index
    %9 = vector.load %arg7[%c0_8, %c17] : memref<8x162xf32, #tpu.memory_space<vmem>>, vector<4x128xf32>
    tpu.vector_store %arg7[%c0_8, %c17], %7 {strides = array<i32>} : memref<8x162xf32, #tpu.memory_space<vmem>>, vector<4x128xf32>,
    %c0_9 = arith.constant 0 : index
    %c145 = arith.constant 145 : index
    %10 = vector.load %arg7[%c0_9, %c145] : memref<8x162xf32, #tpu.memory_space<vmem>>, vector<4x16xf32>
    tpu.vector_store %arg7[%c0_9, %c145], %5 {strides = array<i32>} : memref<8x162xf32, #tpu.memory_space<vmem>>, vector<4x16xf32>,
    %cst = arith.constant 0.000000e+00 : f32
    %11 = vector.broadcast %cst : f32 to vector<4x162xf32>
    %c4 = arith.constant 4 : index
    %c0_10 = arith.constant 0 : index
    %12 = vector.load %arg7[%c4, %c0_10] : memref<8x162xf32, #tpu.memory_space<vmem>>, vector<4x162xf32>
    tpu.vector_store %arg7[%c4, %c0_10], %11 {strides = array<i32>} : memref<8x162xf32, #tpu.memory_space<vmem>>, vector<4x162xf32>,
    %13 = tpu.iota {dimensions = array<i32: 1>} : vector<1x128xi32>
    %c16_i32 = arith.constant 16 : i32
    %c0_i32 = arith.constant 0 : i32
    %14 = arith.cmpi eq, %c16_i32, %c0_i32 : i32
    %c1_i32 = arith.constant 1 : i32
    %15 = arith.select %14, %c1_i32, %c16_i32 : i32
    %16 = vector.broadcast %15 : i32 to vector<1x128xi32>
    %17 = arith.remsi %13, %16 : vector<1x128xi32>
    %c0_i32_11 = arith.constant 0 : i32
    %18 = vector.broadcast %c0_i32_11 : i32 to vector<1x128xi32>
    %19 = arith.cmpi ne, %17, %18 : vector<1x128xi32>
    %c0_i32_12 = arith.constant 0 : i32
    %20 = vector.broadcast %c0_i32_12 : i32 to vector<1x128xi32>
    %21 = arith.cmpi slt, %17, %20 : vector<1x128xi32>
    %c0_i32_13 = arith.constant 0 : i32
    %22 = arith.cmpi slt, %15, %c0_i32_13 : i32
    %23 = vector.broadcast %22 : i1 to vector<1x128xi1>
    %24 = vector.broadcast %23 : vector<1x128xi1> to vector<1x128xi1>
    %25 = arith.xori %21, %24 : vector<1x128xi1>
    %26 = arith.andi %25, %19 : vector<1x128xi1>
    %27 = vector.broadcast %15 : i32 to vector<1x128xi32>
    %28 = arith.addi %17, %27 : vector<1x128xi32>
    %29 = arith.select %26, %28, %17 : vector<1x128xi1>, vector<1x128xi32>
    %c1_i32_14 = arith.constant 1 : i32
    %30 = vector.broadcast %c1_i32_14 : i32 to vector<1x128xi32>
    %31 = arith.cmpi sge, %29, %30 : vector<1x128xi32>
    %c14_i32 = arith.constant 14 : i32
    %32 = vector.broadcast %c14_i32 : i32 to vector<1x128xi32>
    %33 = arith.cmpi sle, %29, %32 : vector<1x128xi32>
    %c0_15 = arith.constant 0 : index
    %c1_16 = arith.constant 1 : index
    %34 = vector.load %arg7[%c0_15, %c1_16] : memref<8x162xf32, #tpu.memory_space<vmem>>, vector<8x128xf32>
    %c1_i32_17 = arith.constant 1 : i32
    %35 = tpu.dynamic_rotate %34 by %c1_i32_17 dim 1 : vector<8x128xf32>, i32 -> vector<8x128xf32>
    %cst_18 = arith.constant 0.000000e+00 : f32
    %36 = vector.broadcast %cst_18 : f32 to vector<8x128xf32>
    %37 = vector.shape_cast %31 : vector<1x128xi1> to vector<1x128xi1>
    %38 = vector.broadcast %37 : vector<1x128xi1> to vector<8x128xi1>
    %39 = arith.select %38, %35, %36 : vector<8x128xi1>, vector<8x128xf32>
    %c0_19 = arith.constant 0 : index
    %c0_20 = arith.constant 0 : index
    %40 = vector.load %arg8[%c0_19, %c0_20] : memref<24x128xf32, #tpu.memory_space<vmem>>, vector<8x128xf32>
    tpu.vector_store %arg8[%c0_19, %c0_20], %39 {strides = array<i32>} : memref<24x128xf32, #tpu.memory_space<vmem>>, vector<8x128xf32>,
    %c8 = arith.constant 8 : index
    %c0_21 = arith.constant 0 : index
    %41 = vector.load %arg8[%c8, %c0_21] : memref<24x128xf32, #tpu.memory_space<vmem>>, vector<8x128xf32>
    tpu.vector_store %arg8[%c8, %c0_21], %34 {strides = array<i32>} : memref<24x128xf32, #tpu.memory_space<vmem>>, vector<8x128xf32>,
    %c127_i32 = arith.constant 127 : i32
    %42 = tpu.dynamic_rotate %34 by %c127_i32 dim 1 : vector<8x128xf32>, i32 -> vector<8x128xf32>
    %cst_22 = arith.constant 0.000000e+00 : f32
    %43 = vector.broadcast %cst_22 : f32 to vector<8x128xf32>
    %44 = vector.shape_cast %33 : vector<1x128xi1> to vector<1x128xi1>
    %45 = vector.broadcast %44 : vector<1x128xi1> to vector<8x128xi1>
    %46 = arith.select %45, %42, %43 : vector<8x128xi1>, vector<8x128xf32>
    %c16 = arith.constant 16 : index
    %c0_23 = arith.constant 0 : index
    %47 = vector.load %arg8[%c16, %c0_23] : memref<24x128xf32, #tpu.memory_space<vmem>>, vector<8x128xf32>
    tpu.vector_store %arg8[%c16, %c0_23], %46 {strides = array<i32>} : memref<24x128xf32, #tpu.memory_space<vmem>>, vector<8x128xf32>,
    %c0_24 = arith.constant 0 : index
    %c0_25 = arith.constant 0 : index
    %c0_26 = arith.constant 0 : index
    %48 = vector.load %arg4[%c0_24, %c0_25, %c0_26] : memref<3x8x24xf32, #tpu.memory_space<vmem>>, vector<1x8x24xf32>
    %49 = vector.shape_cast %48 : vector<1x8x24xf32> to vector<8x24xf32>
    %c0_27 = arith.constant 0 : index
    %c0_28 = arith.constant 0 : index
    %50 = vector.load %arg8[%c0_27, %c0_28] : memref<24x128xf32, #tpu.memory_space<vmem>>, vector<24x128xf32>
    %cst_29 = arith.constant dense<0.000000e+00> : vector<8x128xf32>
    %51 = tpu.matmul %49, %50, %cst_29 {dimension_numbers = #tpu.dot_dimension_numbers<[1], [0], [0], [1], [0, 0, 1, 1], [], []>} : vector<8x24xf32>, vector<24x128xf32>, vector<8x128xf32> -> vector<8x128xf32>
    %c0_30 = arith.constant 0 : index
    %c0_31 = arith.constant 0 : index
    %52 = vector.load %arg9[%c0_30, %c0_31] : memref<8x128xf32, #tpu.memory_space<vmem>>, vector<8x128xf32>
    tpu.vector_store %arg9[%c0_30, %c0_31], %51 {strides = array<i32>} : memref<8x128xf32, #tpu.memory_space<vmem>>, vector<8x128xf32>,
    %c0_32 = arith.constant 0 : index
    %c17_33 = arith.constant 17 : index
    %53 = vector.load %arg7[%c0_32, %c17_33] : memref<8x162xf32, #tpu.memory_space<vmem>>, vector<8x128xf32>
    %c1_i32_34 = arith.constant 1 : i32
    %54 = tpu.dynamic_rotate %53 by %c1_i32_34 dim 1 : vector<8x128xf32>, i32 -> vector<8x128xf32>
    %cst_35 = arith.constant 0.000000e+00 : f32
    %55 = vector.broadcast %cst_35 : f32 to vector<8x128xf32>
    %56 = vector.shape_cast %31 : vector<1x128xi1> to vector<1x128xi1>
    %57 = vector.broadcast %56 : vector<1x128xi1> to vector<8x128xi1>
    %58 = arith.select %57, %54, %55 : vector<8x128xi1>, vector<8x128xf32>
    %c0_36 = arith.constant 0 : index
    %c0_37 = arith.constant 0 : index
    %59 = vector.load %arg8[%c0_36, %c0_37] : memref<24x128xf32, #tpu.memory_space<vmem>>, vector<8x128xf32>
    tpu.vector_store %arg8[%c0_36, %c0_37], %58 {strides = array<i32>} : memref<24x128xf32, #tpu.memory_space<vmem>>, vector<8x128xf32>,
    %c8_38 = arith.constant 8 : index
    %c0_39 = arith.constant 0 : index
    %60 = vector.load %arg8[%c8_38, %c0_39] : memref<24x128xf32, #tpu.memory_space<vmem>>, vector<8x128xf32>
    tpu.vector_store %arg8[%c8_38, %c0_39], %53 {strides = array<i32>} : memref<24x128xf32, #tpu.memory_space<vmem>>, vector<8x128xf32>,
    %c127_i32_40 = arith.constant 127 : i32
    %61 = tpu.dynamic_rotate %53 by %c127_i32_40 dim 1 : vector<8x128xf32>, i32 -> vector<8x128xf32>
    %cst_41 = arith.constant 0.000000e+00 : f32
    %62 = vector.broadcast %cst_41 : f32 to vector<8x128xf32>
    %63 = vector.shape_cast %33 : vector<1x128xi1> to vector<1x128xi1>
    %64 = vector.broadcast %63 : vector<1x128xi1> to vector<8x128xi1>
    %65 = arith.select %64, %61, %62 : vector<8x128xi1>, vector<8x128xf32>
    %c16_42 = arith.constant 16 : index
    %c0_43 = arith.constant 0 : index
    %66 = vector.load %arg8[%c16_42, %c0_43] : memref<24x128xf32, #tpu.memory_space<vmem>>, vector<8x128xf32>
    tpu.vector_store %arg8[%c16_42, %c0_43], %65 {strides = array<i32>} : memref<24x128xf32, #tpu.memory_space<vmem>>, vector<8x128xf32>,
    %c1_44 = arith.constant 1 : index
    %c0_45 = arith.constant 0 : index
    %c0_46 = arith.constant 0 : index
    %67 = vector.load %arg4[%c1_44, %c0_45, %c0_46] : memref<3x8x24xf32, #tpu.memory_space<vmem>>, vector<1x8x24xf32>
    %68 = vector.shape_cast %67 : vector<1x8x24xf32> to vector<8x24xf32>
    %c0_47 = arith.constant 0 : index
    %c0_48 = arith.constant 0 : index
    %69 = vector.load %arg8[%c0_47, %c0_48] : memref<24x128xf32, #tpu.memory_space<vmem>>, vector<24x128xf32>
    %cst_49 = arith.constant dense<0.000000e+00> : vector<8x128xf32>
    %70 = tpu.matmul %68, %69, %cst_49 {dimension_numbers = #tpu.dot_dimension_numbers<[1], [0], [0], [1], [0, 0, 1, 1], [], []>} : vector<8x24xf32>, vector<24x128xf32>, vector<8x128xf32> -> vector<8x128xf32>
    %c0_50 = arith.constant 0 : index
    %c0_51 = arith.constant 0 : index
    %71 = vector.load %arg9[%c0_50, %c0_51] : memref<8x128xf32, #tpu.memory_space<vmem>>, vector<8x128xf32>
    %72 = arith.addf %71, %70 : vector<8x128xf32>
    %c0_52 = arith.constant 0 : index
    %c0_53 = arith.constant 0 : index
    %73 = vector.load %arg9[%c0_52, %c0_53] : memref<8x128xf32, #tpu.memory_space<vmem>>, vector<8x128xf32>
    tpu.vector_store %arg9[%c0_52, %c0_53], %72 {strides = array<i32>} : memref<8x128xf32, #tpu.memory_space<vmem>>, vector<8x128xf32>,
    %c0_54 = arith.constant 0 : index
    %c33 = arith.constant 33 : index
    %74 = vector.load %arg7[%c0_54, %c33] : memref<8x162xf32, #tpu.memory_space<vmem>>, vector<8x128xf32>
    %c1_i32_55 = arith.constant 1 : i32
    %75 = tpu.dynamic_rotate %74 by %c1_i32_55 dim 1 : vector<8x128xf32>, i32 -> vector<8x128xf32>
    %cst_56 = arith.constant 0.000000e+00 : f32
    %76 = vector.broadcast %cst_56 : f32 to vector<8x128xf32>
    %77 = vector.shape_cast %31 : vector<1x128xi1> to vector<1x128xi1>
    %78 = vector.broadcast %77 : vector<1x128xi1> to vector<8x128xi1>
    %79 = arith.select %78, %75, %76 : vector<8x128xi1>, vector<8x128xf32>
    %c0_57 = arith.constant 0 : index
    %c0_58 = arith.constant 0 : index
    %80 = vector.load %arg8[%c0_57, %c0_58] : memref<24x128xf32, #tpu.memory_space<vmem>>, vector<8x128xf32>
    tpu.vector_store %arg8[%c0_57, %c0_58], %79 {strides = array<i32>} : memref<24x128xf32, #tpu.memory_space<vmem>>, vector<8x128xf32>,
    %c8_59 = arith.constant 8 : index
    %c0_60 = arith.constant 0 : index
    %81 = vector.load %arg8[%c8_59, %c0_60] : memref<24x128xf32, #tpu.memory_space<vmem>>, vector<8x128xf32>
    tpu.vector_store %arg8[%c8_59, %c0_60], %74 {strides = array<i32>} : memref<24x128xf32, #tpu.memory_space<vmem>>, vector<8x128xf32>,
    %c127_i32_61 = arith.constant 127 : i32
    %82 = tpu.dynamic_rotate %74 by %c127_i32_61 dim 1 : vector<8x128xf32>, i32 -> vector<8x128xf32>
    %cst_62 = arith.constant 0.000000e+00 : f32
    %83 = vector.broadcast %cst_62 : f32 to vector<8x128xf32>
    %84 = vector.shape_cast %33 : vector<1x128xi1> to vector<1x128xi1>
    %85 = vector.broadcast %84 : vector<1x128xi1> to vector<8x128xi1>
    %86 = arith.select %85, %82, %83 : vector<8x128xi1>, vector<8x128xf32>
    %c16_63 = arith.constant 16 : index
    %c0_64 = arith.constant 0 : index
    %87 = vector.load %arg8[%c16_63, %c0_64] : memref<24x128xf32, #tpu.memory_space<vmem>>, vector<8x128xf32>
    tpu.vector_store %arg8[%c16_63, %c0_64], %86 {strides = array<i32>} : memref<24x128xf32, #tpu.memory_space<vmem>>, vector<8x128xf32>,
    %c2 = arith.constant 2 : index
    %c0_65 = arith.constant 0 : index
    %c0_66 = arith.constant 0 : index
    %88 = vector.load %arg4[%c2, %c0_65, %c0_66] : memref<3x8x24xf32, #tpu.memory_space<vmem>>, vector<1x8x24xf32>
    %89 = vector.shape_cast %88 : vector<1x8x24xf32> to vector<8x24xf32>
    %c0_67 = arith.constant 0 : index
    %c0_68 = arith.constant 0 : index
    %90 = vector.load %arg8[%c0_67, %c0_68] : memref<24x128xf32, #tpu.memory_space<vmem>>, vector<24x128xf32>
    %cst_69 = arith.constant dense<0.000000e+00> : vector<8x128xf32>
    %91 = tpu.matmul %89, %90, %cst_69 {dimension_numbers = #tpu.dot_dimension_numbers<[1], [0], [0], [1], [0, 0, 1, 1], [], []>} : vector<8x24xf32>, vector<24x128xf32>, vector<8x128xf32> -> vector<8x128xf32>
    %c0_70 = arith.constant 0 : index
    %c0_71 = arith.constant 0 : index
    %92 = vector.load %arg9[%c0_70, %c0_71] : memref<8x128xf32, #tpu.memory_space<vmem>>, vector<8x128xf32>
    %93 = arith.addf %92, %91 : vector<8x128xf32>
    %c0_72 = arith.constant 0 : index
    %c0_73 = arith.constant 0 : index
    %94 = vector.load %arg9[%c0_72, %c0_73] : memref<8x128xf32, #tpu.memory_space<vmem>>, vector<8x128xf32>
    tpu.vector_store %arg9[%c0_72, %c0_73], %93 {strides = array<i32>} : memref<8x128xf32, #tpu.memory_space<vmem>>, vector<8x128xf32>,
    %c0_74 = arith.constant 0 : index
    %c0_75 = arith.constant 0 : index
    %95 = vector.load %arg9[%c0_74, %c0_75] : memref<8x128xf32, #tpu.memory_space<vmem>>, vector<8x128xf32>
    %c0_76 = arith.constant 0 : index
    %c0_77 = arith.constant 0 : index
    %96 = vector.load %arg5[%c0_76, %c0_77] : memref<8x1xf32, #tpu.memory_space<vmem>>, vector<8x1xf32>
    %97 = vector.broadcast %96 : vector<8x1xf32> to vector<8x128xf32>
    %98 = arith.addf %95, %97 : vector<8x128xf32>
    %c0_78 = arith.constant 0 : index
    %c0_79 = arith.constant 0 : index
    %c0_80 = arith.constant 0 : index
    %99 = vector.load %arg6[%c0_78, %c0_79, %c0_80] : memref<1x8x128xf32, #tpu.memory_space<vmem>>, vector<1x8x128xf32>
    %100 = vector.shape_cast %99 : vector<1x8x128xf32> to vector<8x128xf32>
    %101 = vector.shape_cast %98 : vector<8x128xf32> to vector<1x8x128xf32>
    tpu.vector_store %arg6[%c0_78, %c0_79, %c0_80], %101 {strides = array<i32>} : memref<1x8x128xf32, #tpu.memory_space<vmem>>, vector<1x8x128xf32>,
    return
  }
  func.func @transform_0(%arg0: i32, %arg1: i32) -> (i32, i32, i32) {
    %c0_i32 = arith.constant 0 : i32
    %c0_i32_0 = arith.constant 0 : i32
    return %arg0, %c0_i32, %arg1 : i32, i32, i32
  }
  func.func @transform_1(%arg0: i32, %arg1: i32) -> (i32, i32, i32, i32, i32) {
    %c0_i32 = arith.constant 0 : i32
    %c0_i32_0 = arith.constant 0 : i32
    %c0_i32_1 = arith.constant 0 : i32
    %c0_i32_2 = arith.constant 0 : i32
    return %arg0, %arg1, %c0_i32, %c0_i32_0, %c0_i32_1 : i32, i32, i32, i32, i32
  }
  func.func @transform_2(%arg0: i32, %arg1: i32) -> (i32, i32, i32) {
    %c0_i32 = arith.constant 0 : i32
    %c0_i32_0 = arith.constant 0 : i32
    %c0_i32_1 = arith.constant 0 : i32
    %c0_i32_2 = arith.constant 0 : i32
    return %c0_i32, %c0_i32_0, %c0_i32_1 : i32, i32, i32
  }
  func.func @transform_3(%arg0: i32, %arg1: i32) -> (i32, i32) {
    %c0_i32 = arith.constant 0 : i32
    %c0_i32_0 = arith.constant 0 : i32
    %c0_i32_1 = arith.constant 0 : i32
    return %c0_i32, %c0_i32_0 : i32, i32
  }
  func.func @transform_4(%arg0: i32, %arg1: i32) -> (i32, i32, i32) {
    %c0_i32 = arith.constant 0 : i32
    %c0_i32_0 = arith.constant 0 : i32
    return %arg0, %c0_i32, %arg1 : i32, i32, i32
  }
}

</mosaic_0001>

<llo_original>
// kernel: conv_block_forward.1
$region0: #{conv_block_forward.1}
  #allocation0 [shape = 'u32[]', space=smem, size = 0x4, offset = 0x4, fixed_abs, tag = 'smem constant byte address 0x4 - core index']
  #allocation1 [shape = 'u32[144,128]{1,0:T(1,128)}', space=vmem, size = 0x12000, scoped, tag = 'internal scratch']
  #allocation2 [shape = 'f32[8,162]{1,0:T(8,128)}', space=vmem, size = 0x2000, scoped, tag = 'scratch operand']
  #allocation3 [shape = 'f32[24,128]{1,0:T(8,128)}', space=vmem, size = 0x3000, scoped, tag = 'scratch operand']
  #allocation4 [shape = 'f32[8,128]{1,0:T(8,128)}', space=vmem, size = 0x1000, scoped, tag = 'scratch operand']
  %s0 = inlined_call_operand.vmem [shape: f32[2,4,256], index: 0, kind: input, shape index: {}]
  %s1 = inlined_call_operand.vmem [shape: f32[2,2,2,4,16], index: 1, kind: input, shape index: {}]
  %s2 = inlined_call_operand.vmem [shape: f32[3,8,24], index: 2, kind: input, shape index: {}]
  %s3 = inlined_call_operand.vmem [shape: f32[8,1], index: 3, kind: input, shape index: {}]
  %s4 = inlined_call_operand.vmem [shape: f32[2,8,256], index: 4, kind: output, shape index: {}]
  %s5 = sld [smem:[#allocation0]]
  $region49: #{conv_block_forward.1} parent=0
    _
  %s7 = ssub.s32 1, %s5
  %s8 = scalar_select 0, %s7, %s5
  loop: start=0, step=1, limit=6
  $region2: #{conv_block_forward.1} parent=0 // loop_pre_header
    _
  $region3: #{conv_block_forward.1} parent=0 // loop_header
    %s10 = sphi 0, %s14
    %p11 = scmp.ge.s32.totalorder %s10, 6
    %s17 = sphi 0, %s29
    %s18 = sphi 0, %s25
    %s19 = sphi 0, %s17
    %s20 = sphi 0, %s18
    %s21 = sphi 0, %s19
    %s22 = sphi 0, %s20
    %s34 = sphi 0, %s36
    %s37 = sphi 0, %s34
    %s38 = sphi 0, %s37
    %s54 = sphi 0, %s38
    %s62 = sphi 0, %s64
    %s65 = sphi 0, %s62
    %s66 = sphi 0, %s65
    %s82 = sphi 0, %s66
    %s86 = sphi 0, %s86
    %s88 = sphi 0, %s86
    %s89 = sphi 0, %s88
    %s103 = sphi 0, %s89
    %s107 = sphi 0, %s107
    %s109 = sphi 0, %s107
    %s110 = sphi 0, %s109
    %s124 = sphi 0, %s110
    %s132 = sphi 0, %s134
    %s135 = sphi 0, %s132
    %s136 = sphi 0, %s135
    %s152 = sphi 0, %s136
  $region4: #{conv_block_forward.1} parent=0 // loop_header_branch
    %13 = sbr.rel (%p11) target = $region8
  $region5: #{conv_block_forward.1} parent=0 // loop_body
    %s15 = ssub.s32 %s10, 1
    %s16 = ssub.s32 %s10, 2
    %s23 = sadd.s32 1, %s18
    %p24 = scmp.ge.s32.totalorder %s23, 2
    %s25 = scalar_select %p24, 0, %s23
    %s26 = sadd.s32 1, %s17
    %s27 = scalar_select %p24, %s26, %s17
    %p28 = scmp.ge.s32.totalorder %s27, 2
    %s29 = scalar_select %p28, 0, %s27
    %s30 = ssub.s32 %s17, %s29
    %s31 = ssub.s32 %s18, %s25
    %s32 = sor.u32 %s30, %s31
    %p33 = scmp.eq.s32.totalorder %s32, 0
    %s35 = sadd.s32 %s34, 1
    %s36 = scalar_select %p33, %s34, %s35
    %p39 = pneg %p33
    %p40 = scmp.eq.s32.totalorder %s10, 3
    %p41 = por %p39, %p40
    %p42 = scmp.ne.s32.totalorder %s34, %s37
    %p43 = scmp.eq.s32.totalorder %s10, 0
    %p44 = por %p42, %p43
    %p45 = scmp.ne.s32.totalorder %s34, %s37
    %p46 = scmp.eq.s32.totalorder %s15, 3
    %p47 = por %p45, %p46
    %p48 = scmp.ne.s32.totalorder %s37, %s38
    %p49 = scmp.eq.s32.totalorder %s15, 0
    %p50 = por %p48, %p49
    %p51 = scmp.ne.s32.totalorder %s37, %s38
    %p52 = scmp.eq.s32.totalorder %s16, 3
    %p53 = por %p51, %p52
    %p55 = scmp.ne.s32.totalorder %s38, %s54
    %p56 = scmp.eq.s32.totalorder %s16, 0
    %p57 = por %p55, %p56
    %s58 = ssub.s32 %s17, %s29
    %s59 = ssub.s32 %s18, %s25
    %s60 = sor.u32 %s58, %s59
    %p61 = scmp.eq.s32.totalorder %s60, 0
    %s63 = sadd.s32 %s62, 1
    %s64 = scalar_select %p61, %s62, %s63
    %p67 = pneg %p61
    %p68 = scmp.eq.s32.totalorder %s10, 3
    %p69 = por %p67, %p68
    %p70 = scmp.ne.s32.totalorder %s62, %s65
    %p71 = scmp.eq.s32.totalorder %s10, 0
    %p72 = por %p70, %p71
    %p73 = scmp.ne.s32.totalorder %s62, %s65
    %p74 = scmp.eq.s32.totalorder %s15, 3
    %p75 = por %p73, %p74
    %p76 = scmp.ne.s32.totalorder %s65, %s66
    %p77 = scmp.eq.s32.totalorder %s15, 0
    %p78 = por %p76, %p77
    %p79 = scmp.ne.s32.totalorder %s65, %s66
    %p80 = scmp.eq.s32.totalorder %s16, 3
    %p81 = por %p79, %p80
    %p83 = scmp.ne.s32.totalorder %s66, %s82
    %p84 = scmp.eq.s32.totalorder %s16, 0
    %p85 = por %p83, %p84
    %s87 = sadd.s32 %s86, 1
    %p90 = scmp.eq.s32.totalorder %s10, 3
    %p91 = scmp.ne.s32.totalorder %s86, %s88
    %p92 = scmp.eq.s32.totalorder %s10, 0
    %p93 = por %p91, %p92
    %p94 = scmp.ne.s32.totalorder %s86, %s88
    %p95 = scmp.eq.s32.totalorder %s15, 3
    %p96 = por %p94, %p95
    %p97 = scmp.ne.s32.totalorder %s88, %s89
    %p98 = scmp.eq.s32.totalorder %s15, 0
    %p99 = por %p97, %p98
    %p100 = scmp.ne.s32.totalorder %s88, %s89
    %p101 = scmp.eq.s32.totalorder %s16, 3
    %p102 = por %p100, %p101
    %p104 = scmp.ne.s32.totalorder %s89, %s103
    %p105 = scmp.eq.s32.totalorder %s16, 0
    %p106 = por %p104, %p105
    %s108 = sadd.s32 %s107, 1
    %p111 = scmp.eq.s32.totalorder %s10, 3
    %p112 = scmp.ne.s32.totalorder %s107, %s109
    %p113 = scmp.eq.s32.totalorder %s10, 0
    %p114 = por %p112, %p113
    %p115 = scmp.ne.s32.totalorder %s107, %s109
    %p116 = scmp.eq.s32.totalorder %s15, 3
    %p117 = por %p115, %p116
    %p118 = scmp.ne.s32.totalorder %s109, %s110
    %p119 = scmp.eq.s32.totalorder %s15, 0
    %p120 = por %p118, %p119
    %p121 = scmp.ne.s32.totalorder %s109, %s110
    %p122 = scmp.eq.s32.totalorder %s16, 3
    %p123 = por %p121, %p122
    %p125 = scmp.ne.s32.totalorder %s110, %s124
    %p126 = scmp.eq.s32.totalorder %s16, 0
    %p127 = por %p125, %p126
    %s128 = ssub.s32 %s17, %s29
    %s129 = ssub.s32 %s18, %s25
    %s130 = sor.u32 %s128, %s129
    %p131 = scmp.eq.s32.totalorder %s130, 0
    %s133 = sadd.s32 %s132, 1
    %s134 = scalar_select %p131, %s132, %s133
    %p137 = pneg %p131
    %p138 = scmp.eq.s32.totalorder %s10, 3
    %p139 = por %p137, %p138
    %p140 = scmp.ne.s32.totalorder %s132, %s135
    %p141 = scmp.eq.s32.totalorder %s10, 0
    %p142 = por %p140, %p141
    %p143 = scmp.ne.s32.totalorder %s132, %s135
    %p144 = scmp.eq.s32.totalorder %s15, 3
    %p145 = por %p143, %p144
    %p146 = scmp.ne.s32.totalorder %s135, %s136
    %p147 = scmp.eq.s32.totalorder %s15, 0
    %p148 = por %p146, %p147
    %p149 = scmp.ne.s32.totalorder %s135, %s136
    %p150 = scmp.eq.s32.totalorder %s16, 3
    %p151 = por %p149, %p150
    %p153 = scmp.ne.s32.totalorder %s136, %s152
    %p154 = scmp.eq.s32.totalorder %s16, 0
    %p155 = por %p153, %p154
    %p156 = scmp.le.s32.totalorder 1, %s10
    %p157 = scmp.lt.s32.totalorder %s10, 5
    %p158 = pnand %p156, %p157
    %p159 = pneg %p158
    // Predicated region
    $region9: #{conv_block_forward.1} parent=5 // pred_check
      _
    $region10: #{conv_block_forward.1} parent=5 // pred_check_branch
      %161 = sbr.rel (%p158) target = $region12
    $region11: #{conv_block_forward.1} parent=5 // pred_region
      %s162 = ssub.s32 %s10, 1
      // Predicated region
      $region13: #{conv_block_forward.1} parent=11 // pred_check
        %p163 = pneg %p99
      $region14: #{conv_block_forward.1} parent=11 // pred_check_branch
        %165 = sbr.rel (%p163) target = $region16
      $region15: #{conv_block_forward.1} parent=11 // pred_region
        _
      $region16: #{conv_block_forward.1} parent=11 // pred_fallthru
        _
      // Predicated region
      $region17: #{conv_block_forward.1} parent=11 // pred_check
        %p166 = pneg %p120
      $region18: #{conv_block_forward.1} parent=11 // pred_check_branch
        %168 = sbr.rel (%p166) target = $region20
      $region19: #{conv_block_forward.1} parent=11 // pred_region
        _
      $region20: #{conv_block_forward.1} parent=11 // pred_fallthru
        _
    $region12: #{conv_block_forward.1} parent=5 // pred_fallthru
      _
    %p169 = scmp.lt.s32.totalorder %s10, 4
    // Predicated region
    $region21: #{conv_block_forward.1} parent=5 // pred_check
      %p170 = pneg %p169
    $region22: #{conv_block_forward.1} parent=5 // pred_check_branch
      %172 = sbr.rel (%p170) target = $region24
    $region23: #{conv_block_forward.1} parent=5 // pred_region
      // Predicated region
      $region25: #{conv_block_forward.1} parent=23 // pred_check
        %p173 = pneg %p44
      $region26: #{conv_block_forward.1} parent=23 // pred_check_branch
        %175 = sbr.rel (%p173) target = $region28
      $region27: #{conv_block_forward.1} parent=23 // pred_region
        %p176 = scmp.lt.s32.totalorder %s17, 1
        %s177 = scalar_select %p176, %s17, 1
        %p178 = scmp.lt.s32.totalorder %s18, 1
        %s179 = scalar_select %p178, %s18, 1
        %s180 = smul.addr %s177, 2
        %s181 = sadd.s32 %s179, %s180
        %s182 = smul.addr %s181, 4
        %s183 = scalar_lea.vmem %s0, %s182
      $region28: #{conv_block_forward.1} parent=23 // pred_fallthru
        _
      // Predicated region
      $region29: #{conv_block_forward.1} parent=23 // pred_check
        %p184 = pneg %p72
      $region30: #{conv_block_forward.1} parent=23 // pred_check_branch
        %186 = sbr.rel (%p184) target = $region32
      $region31: #{conv_block_forward.1} parent=23 // pred_region
        %p187 = scmp.lt.s32.totalorder %s17, 1
        %s188 = scalar_select %p187, %s17, 1
        %p189 = scmp.lt.s32.totalorder %s18, 1
        %s190 = scalar_select %p189, %s18, 1
        %s191 = smul.addr %s190, 2
        %s192 = smul.addr %s188, 4
        %s193 = sadd.s32 %s191, %s192
        %s194 = smul.addr %s193, 4
        %s195 = scalar_lea.vmem %s1, %s194
      $region32: #{conv_block_forward.1} parent=23 // pred_fallthru
        _
    $region24: #{conv_block_forward.1} parent=5 // pred_fallthru
      _
    %p196 = scmp.le.s32.totalorder 1, %s10
    %p197 = scmp.lt.s32.totalorder %s10, 5
    %p198 = pnand %p196, %p197
    %p199 = pneg %p198
    // Predicated region
    $region33: #{conv_block_forward.1} parent=5 // pred_check
      _
    $region34: #{conv_block_forward.1} parent=5 // pred_check_branch
      %201 = sbr.rel (%p198) target = $region36
    $region35: #{conv_block_forward.1} parent=5 // pred_region
      %s202 = ssub.s32 %s10, 1
      %p203 = scmp.lt.s32.totalorder %s19, 1
      %s204 = scalar_select %p203, %s19, 1
      %p205 = scmp.lt.s32.totalorder %s20, 1
      %s206 = scalar_select %p205, %s20, 1
      %s207 = smul.addr %s204, 2
      %s208 = sadd.s32 %s206, %s207
      %s209 = smul.addr %s208, 4
      %s210 = scalar_lea.vmem %s0, %s209
      %p211 = pneg %p50
      %p212 = pneg %p47
      %p213 = scmp.lt.s32.totalorder %s19, 1
      %s214 = scalar_select %p213, %s19, 1
      %p215 = scmp.lt.s32.totalorder %s20, 1
      %s216 = scalar_select %p215, %s20, 1
      %s217 = smul.addr %s216, 2
      %s218 = smul.addr %s214, 4
      %s219 = sadd.s32 %s217, %s218
      %s220 = smul.addr %s219, 4
      %s221 = scalar_lea.vmem %s1, %s220
      %p222 = pneg %p78
      %p223 = pneg %p75
      %p224 = pneg %p99
      %p225 = pneg %p96
      %p226 = pneg %p120
      %p227 = pneg %p117
      %p228 = pneg %p148
      %p229 = pneg %p145
      %p230 = scmp.lt.s32.totalorder %s19, 1
      %s231 = scalar_select %p230, %s19, 1
      %p232 = scmp.lt.s32.totalorder %s20, 1
      %s233 = scalar_select %p232, %s20, 1
      %s234 = smul.addr %s231, 2
      %s235 = sadd.s32 %s233, %s234
      %s236 = smul.addr %s235, 8
      %s237 = scalar_lea.vmem %s4, %s236
      %p238 = scmp.lt.s32.totalorder %s19, 1
      %s239 = scalar_select %p238, %s19, 1
      %p240 = scmp.lt.s32.totalorder %s20, 1
      %s241 = scalar_select %p240, %s20, 1
      %s242 = smul.addr %s239, 2
      %s243 = sadd.s32 %s241, %s242
      %s244 = smul.addr %s243, 4
      %s245 = scalar_lea.vmem %s0, %s244
      %p246 = scmp.lt.s32.totalorder %s19, 1
      %s247 = scalar_select %p246, %s19, 1
      %p248 = scmp.lt.s32.totalorder %s20, 1
      %s249 = scalar_select %p248, %s20, 1
      %s250 = smul.addr %s249, 2
      %s251 = smul.addr %s247, 4
      %s252 = sadd.s32 %s250, %s251
      %s253 = smul.addr %s252, 4
      %s254 = scalar_lea.vmem %s1, %s253
      %p255 = scmp.lt.s32.totalorder %s19, 1
      %s256 = scalar_select %p255, %s19, 1
      %p257 = scmp.lt.s32.totalorder %s20, 1
      %s258 = scalar_select %p257, %s20, 1
      %s259 = smul.addr %s256, 2
      %s260 = sadd.s32 %s258, %s259
      %s261 = smul.addr %s260, 8
      %s262 = scalar_lea.vmem %s4, %s261
      %v263 = vld [vmem:[%s254] sm:$0xf]
      %v264 = vld [vmem:[%s254 + $0x4] sm:$0xf]
      %v265 = vld [vmem:[%s245] sm:$0xf]
      %267 = vrot.lane.b32.xlu0 %v263, 1
      %v268 = vpop.permute.xlu0 %267
      %vm270 = vcmask 134152
      %271 = vst.msk [vmem:[#allocation2] sm:$0xf] %vm270, %v268
      %273 = vrot.lane.b32.xlu0 %v265, 17
      %v274 = vpop.permute.xlu0 %273
      %vm276 = vcmask 1043592
      %277 = vst.msk [vmem:[#allocation2] sm:$0xf] %vm276, %v274
      %vm278 = vcmask 134144
      %279 = vst.msk [vmem:[#allocation2 + $0x8] sm:$0xf] %vm278, %v274
      %281 = vrot.lane.b32.xlu0 %v264, 17
      %v282 = vpop.permute.xlu0 %281
      %vm284 = vcmask 265352
      %285 = vst.msk [vmem:[#allocation2 + $0x8] sm:$0xf] %vm284, %v282
      %286 = vst [vmem:[#allocation2] sm:$0xf0] 0.0
      %vm287 = vcmask 277508
      %288 = vst.msk [vmem:[#allocation2 + $0x8] sm:$0xf0] %vm287, 0.0
      %v289 = vlaneseq
      %v290 = vand.u32 %v289, 127
      %vm291 = vcmp.lt.s32.totalorder %v290, 0
      %v292 = vsub.s32 0, %v290
      %v293 = vsel %vm291, %v292, %v290
      %v294 = vshrl.u32 %v293, 4
      %v295 = vand.u32 %v293, 15
      %v296 = vsub.s32 0, %v295
      %v297 = vsel %vm291, %v296, %v295
      %vm298 = vcmp.ne.s32.totalorder %v297, 0
      %vm299 = vcmp.lt.s32.totalorder %v297, 0
      %vm300 = vmand %vm299, %vm298
      %v301 = vadd.s32 %v297, 16
      %v302 = vsel %vm300, %v301, %v297
      %vm303 = vcmp.ge.s32.totalorder %v302, 1
      %vm304 = vcmp.le.s32.totalorder %v302, 14
      %v305 = vld [vmem:[#allocation2] sm:$0xff]
      %v306 = vld [vmem:[#allocation2 + $0x8] sm:$0xff]
      %309 = vrot.lane.b32.xlu0 %v305, 127
      %v310 = vpop.permute.xlu0 %309
      %311 = vrot.lane.b32.xlu0 %v306, 127
      %v312 = vpop.permute.xlu0 %311
      %vm313 = vcmask 1039360
      %v314 = vsel %vm313, %v310, %v312
      %316 = vrot.lane.b32.xlu0 %v314, 1
      %v317 = vpop.permute.xlu0 %316
      %v318 = vsel %vm303, 1, 0
      %vm319 = vcmp.eq.s32.totalorder %v318, 1
      %v320 = vsel %vm319, %v317, 0.0
      %321 = vst [vmem:[#allocation3] sm:$0xff] %v320
      %322 = vst [vmem:[#allocation3 + $0x8] sm:$0xff] %v314
      %323 = vrot.lane.b32.xlu0 %v314, 127
      %v324 = vpop.permute.xlu0 %323
      %v325 = vsel %vm304, 1, 0
      %vm326 = vcmp.eq.s32.totalorder %v325, 1
      %v327 = vsel %vm326, %v324, 0.0
      %328 = vst [vmem:[#allocation3 + $0x10] sm:$0xff] %v327
      %v329 = vld [vmem:[%s2] sm:$0xff]
      %v330 = vld [vmem:[#allocation3] sm:$0xff]
      %v331 = vld [vmem:[#allocation3 + $0x8] sm:$0xff]
      %v332 = vld [vmem:[#allocation3 + $0x10] sm:$0xff]
      %vm333 = vcmask 195584
      %v335 = vsel %vm333, %v329, 0
      %337 = vmatprep.subr.mxu0 0.0
      %338 = vmatpush1.msra.mxu0 %v330
      %339 = vmatprep.subr.mxu0 0.0
      %340 = vmatpush1.msra.mxu0 %v331
      %341 = vmatprep.subr.mxu0 0.0
      %342 = vmatpush1.msra.mxu0 %v332
      %343 = vmatprep.subr.mxu0 0.0
      %344 = vmatpush1.msra.mxu0 0.0
      %345 = vmatprep.subr.mxu0 0.0
      %346 = vmatpush1.msra.mxu0 0.0
      %347 = vmatprep.subr.mxu0 0.0
      %348 = vmatpush1.msra.mxu0 0.0
      %349 = vmatprep.subr.mxu0 0.0
      %350 = vmatpush1.msra.mxu0 0.0
      %351 = vmatprep.subr.mxu0 0.0
      %352 = vmatpush1.msra.mxu0 0.0
      %353 = vmatprep.subr.mxu0 0.0
      %354 = vmatpush1.msra.mxu0 0.0
      %355 = vmatprep.subr.mxu0 0.0
      %356 = vmatpush1.msra.mxu0 0.0
      %357 = vmatprep.subr.mxu0 0.0
      %358 = vmatpush1.msra.mxu0 0.0
      %359 = vmatprep.subr.mxu0 0.0
      %360 = vmatpush1.msra.mxu0 0.0
      %361 = vmatprep.subr.mxu0 0.0
      %362 = vmatpush1.msra.mxu0 0.0
      %363 = vmatprep.subr.mxu0 0.0
      %364 = vmatpush1.msra.mxu0 0.0
      %365 = vmatprep.subr.mxu0 0.0
      %366 = vmatpush1.msra.mxu0 0.0
      %367 = vmatprep.subr.mxu0 0.0
      %368 = vmatpush1.msra.mxu0 0.0
      %369 = vmatprep.subr.mxu0 0.0
      %370 = vmatpush1.msra.mxu0 0.0
      %371 = vmatprep.subr.mxu0 0.0
      %372 = vmatpush1.msra.mxu0 0.0
      %373 = vmatprep.subr.mxu0 0.0
      %374 = vmatpush1.msra.mxu0 0.0
      %375 = vmatprep.subr.mxu0 0.0
      %376 = vmatpush1.msra.mxu0 0.0
      %377 = vmatprep.subr.mxu0 0.0
      %378 = vmatpush1.msra.mxu0 0.0
      %379 = vmatprep.subr.mxu0 0.0
      %380 = vmatpush1.msra.mxu0 0.0
      %381 = vmatprep.subr.mxu0 0.0
      %382 = vmatpush1.msra.mxu0 0.0
      %383 = vmatprep.subr.mxu0 0.0
      %384 = vmatpush1.msra.mxu0 0.0
      %385 = vmatprep.subr.mxu0 0.0
      %386 = vmatpush1.msra.mxu0 0.0
      %387 = vmatprep.subr.mxu0 0.0
      %388 = vmatpush1.msra.mxu0 0.0
      %389 = vmatprep.subr.mxu0 0.0
      %390 = vmatpush1.msra.mxu0 0.0
      %391 = vmatprep.subr.mxu0 0.0
      %392 = vmatpush1.msra.mxu0 0.0
      %393 = vmatprep.subr.mxu0 0.0
      %394 = vmatpush1.msra.mxu0 0.0
      %395 = vmatprep.subr.mxu0 0.0
      %396 = vmatpush1.msra.mxu0 0.0
      %397 = vmatprep.subr.mxu0 0.0
      %398 = vmatpush1.msra.mxu0 0.0
      %399 = vmatprep.subr.mxu0 0.0
      %400 = vmatpush1.msra.mxu0 0.0
      %401 = vmatprep.mubr.f32.mxu0 0.0
      %402 = vmatmul.mubr.f32.gmra.mrb[0].mxu0 %v335
      %v403 = vpop.f32.mrb[0].mxu0
      %v404 = vadd.f32 0.0, %v403
      %v405 = vpop.f32.mrb[0].mxu0
      %406 = vdwg.mxu0
      %407 = vst [vmem:[#allocation4] sm:$0xff] %v404
      %v408 = vld [vmem:[#allocation2] sm:$0xff]
      %v409 = vld [vmem:[#allocation2 + $0x8] sm:$0xff]
      %412 = vrot.lane.b32.xlu0 %v408, 111
      %v413 = vpop.permute.xlu0 %412
      %414 = vrot.lane.b32.xlu0 %v409, 111
      %v415 = vpop.permute.xlu0 %414
      %vm416 = vcmask 908288
      %v417 = vsel %vm416, %v413, %v415
      %419 = vrot.lane.b32.xlu0 %v417, 1
      %v420 = vpop.permute.xlu0 %419
      %v421 = vsel %vm319, %v420, 0.0
      %422 = vst [vmem:[#allocation3] sm:$0xff] %v421
      %423 = vst [vmem:[#allocation3 + $0x8] sm:$0xff] %v417
      %424 = vrot.lane.b32.xlu0 %v417, 127
      %v425 = vpop.permute.xlu0 %424
      %v426 = vsel %vm326, %v425, 0.0
      %427 = vst [vmem:[#allocation3 + $0x10] sm:$0xff] %v426
      %s428 = scalar_lea.vmem %s2, 8
      %v429 = vld [vmem:[%s428] sm:$0xff]
      %v430 = vld [vmem:[#allocation3] sm:$0xff]
      %v431 = vld [vmem:[#allocation3 + $0x8] sm:$0xff]
      %v432 = vld [vmem:[#allocation3 + $0x10] sm:$0xff]
      %v434 = vsel %vm333, %v429, 0
      %436 = vmatprep.subr.mxu0 0.0
      %437 = vmatpush1.msra.mxu0 %v430
      %438 = vmatprep.subr.mxu0 0.0
      %439 = vmatpush1.msra.mxu0 %v431
      %440 = vmatprep.subr.mxu0 0.0
      %441 = vmatpush1.msra.mxu0 %v432
      %442 = vmatprep.subr.mxu0 0.0
      %443 = vmatpush1.msra.mxu0 0.0
      %444 = vmatprep.subr.mxu0 0.0
      %445 = vmatpush1.msra.mxu0 0.0
      %446 = vmatprep.subr.mxu0 0.0
      %447 = vmatpush1.msra.mxu0 0.0
      %448 = vmatprep.subr.mxu0 0.0
      %449 = vmatpush1.msra.mxu0 0.0
      %450 = vmatprep.subr.mxu0 0.0
      %451 = vmatpush1.msra.mxu0 0.0
      %452 = vmatprep.subr.mxu0 0.0
      %453 = vmatpush1.msra.mxu0 0.0
      %454 = vmatprep.subr.mxu0 0.0
      %455 = vmatpush1.msra.mxu0 0.0
      %456 = vmatprep.subr.mxu0 0.0
      %457 = vmatpush1.msra.mxu0 0.0
      %458 = vmatprep.subr.mxu0 0.0
      %459 = vmatpush1.msra.mxu0 0.0
      %460 = vmatprep.subr.mxu0 0.0
      %461 = vmatpush1.msra.mxu0 0.0
      %462 = vmatprep.subr.mxu0 0.0
      %463 = vmatpush1.msra.mxu0 0.0
      %464 = vmatprep.subr.mxu0 0.0
      %465 = vmatpush1.msra.mxu0 0.0
      %466 = vmatprep.subr.mxu0 0.0
      %467 = vmatpush1.msra.mxu0 0.0
      %468 = vmatprep.subr.mxu0 0.0
      %469 = vmatpush1.msra.mxu0 0.0
      %470 = vmatprep.subr.mxu0 0.0
      %471 = vmatpush1.msra.mxu0 0.0
      %472 = vmatprep.subr.mxu0 0.0
      %473 = vmatpush1.msra.mxu0 0.0
      %474 = vmatprep.subr.mxu0 0.0
      %475 = vmatpush1.msra.mxu0 0.0
      %476 = vmatprep.subr.mxu0 0.0
      %477 = vmatpush1.msra.mxu0 0.0
      %478 = vmatprep.subr.mxu0 0.0
      %479 = vmatpush1.msra.mxu0 0.0
      %480 = vmatprep.subr.mxu0 0.0
      %481 = vmatpush1.msra.mxu0 0.0
      %482 = vmatprep.subr.mxu0 0.0
      %483 = vmatpush1.msra.mxu0 0.0
      %484 = vmatprep.subr.mxu0 0.0
      %485 = vmatpush1.msra.mxu0 0.0
      %486 = vmatprep.subr.mxu0 0.0
      %487 = vmatpush1.msra.mxu0 0.0
      %488 = vmatprep.subr.mxu0 0.0
      %489 = vmatpush1.msra.mxu0 0.0
      %490 = vmatprep.subr.mxu0 0.0
      %491 = vmatpush1.msra.mxu0 0.0
      %492 = vmatprep.subr.mxu0 0.0
      %493 = vmatpush1.msra.mxu0 0.0
      %494 = vmatprep.subr.mxu0 0.0
      %495 = vmatpush1.msra.mxu0 0.0
      %496 = vmatprep.subr.mxu0 0.0
      %497 = vmatpush1.msra.mxu0 0.0
      %498 = vmatprep.subr.mxu0 0.0
      %499 = vmatpush1.msra.mxu0 0.0
      %500 = vmatprep.mubr.f32.mxu0 0.0
      %501 = vmatmul.mubr.f32.gmra.mrb[0].mxu0 %v434
      %v502 = vpop.f32.mrb[0].mxu0
      %v503 = vadd.f32 0.0, %v502
      %v504 = vpop.f32.mrb[0].mxu0
      %505 = vdwg.mxu0
      %v506 = vld [vmem:[#allocation4] sm:$0xff]
      %v507 = vadd.f32 %v506, %v503
      %508 = vst [vmem:[#allocation4] sm:$0xff] %v507
      %v509 = vld [vmem:[#allocation2] sm:$0xff]
      %v510 = vld [vmem:[#allocation2 + $0x8] sm:$0xff]
      %513 = vrot.lane.b32.xlu0 %v509, 95
      %v514 = vpop.permute.xlu0 %513
      %515 = vrot.lane.b32.xlu0 %v510, 95
      %v516 = vpop.permute.xlu0 %515
      %vm517 = vcmask 777216
      %v518 = vsel %vm517, %v514, %v516
      %520 = vrot.lane.b32.xlu0 %v518, 1
      %v521 = vpop.permute.xlu0 %520
      %v522 = vsel %vm319, %v521, 0.0
      %523 = vst [vmem:[#allocation3] sm:$0xff] %v522
      %524 = vst [vmem:[#allocation3 + $0x8] sm:$0xff] %v518
      %525 = vrot.lane.b32.xlu0 %v518, 127
      %v526 = vpop.permute.xlu0 %525
      %v527 = vsel %vm326, %v526, 0.0
      %528 = vst [vmem:[#allocation3 + $0x10] sm:$0xff] %v527
      %s529 = scalar_lea.vmem %s2, 16
      %v530 = vld [vmem:[%s529] sm:$0xff]
      %v531 = vld [vmem:[#allocation3] sm:$0xff]
      %v532 = vld [vmem:[#allocation3 + $0x8] sm:$0xff]
      %v533 = vld [vmem:[#allocation3 + $0x10] sm:$0xff]
      %v535 = vsel %vm333, %v530, 0
      %537 = vmatprep.subr.mxu0 0.0
      %538 = vmatpush1.msra.mxu0 %v531
      %539 = vmatprep.subr.mxu0 0.0
      %540 = vmatpush1.msra.mxu0 %v532
      %541 = vmatprep.subr.mxu0 0.0
      %542 = vmatpush1.msra.mxu0 %v533
      %543 = vmatprep.subr.mxu0 0.0
      %544 = vmatpush1.msra.mxu0 0.0
      %545 = vmatprep.subr.mxu0 0.0
      %546 = vmatpush1.msra.mxu0 0.0
      %547 = vmatprep.subr.mxu0 0.0
      %548 = vmatpush1.msra.mxu0 0.0
      %549 = vmatprep.subr.mxu0 0.0
      %550 = vmatpush1.msra.mxu0 0.0
      %551 = vmatprep.subr.mxu0 0.0
      %552 = vmatpush1.msra.mxu0 0.0
      %553 = vmatprep.subr.mxu0 0.0
      %554 = vmatpush1.msra.mxu0 0.0
      %555 = vmatprep.subr.mxu0 0.0
      %556 = vmatpush1.msra.mxu0 0.0
      %557 = vmatprep.subr.mxu0 0.0
      %558 = vmatpush1.msra.mxu0 0.0
      %559 = vmatprep.subr.mxu0 0.0
      %560 = vmatpush1.msra.mxu0 0.0
      %561 = vmatprep.subr.mxu0 0.0
      %562 = vmatpush1.msra.mxu0 0.0
      %563 = vmatprep.subr.mxu0 0.0
      %564 = vmatpush1.msra.mxu0 0.0
      %565 = vmatprep.subr.mxu0 0.0
      %566 = vmatpush1.msra.mxu0 0.0
      %567 = vmatprep.subr.mxu0 0.0
      %568 = vmatpush1.msra.mxu0 0.0
      %569 = vmatprep.subr.mxu0 0.0
      %570 = vmatpush1.msra.mxu0 0.0
      %571 = vmatprep.subr.mxu0 0.0
      %572 = vmatpush1.msra.mxu0 0.0
      %573 = vmatprep.subr.mxu0 0.0
      %574 = vmatpush1.msra.mxu0 0.0
      %575 = vmatprep.subr.mxu0 0.0
      %576 = vmatpush1.msra.mxu0 0.0
      %577 = vmatprep.subr.mxu0 0.0
      %578 = vmatpush1.msra.mxu0 0.0
      %579 = vmatprep.subr.mxu0 0.0
      %580 = vmatpush1.msra.mxu0 0.0
      %581 = vmatprep.subr.mxu0 0.0
      %582 = vmatpush1.msra.mxu0 0.0
      %583 = vmatprep.subr.mxu0 0.0
      %584 = vmatpush1.msra.mxu0 0.0
      %585 = vmatprep.subr.mxu0 0.0
      %586 = vmatpush1.msra.mxu0 0.0
      %587 = vmatprep.subr.mxu0 0.0
      %588 = vmatpush1.msra.mxu0 0.0
      %589 = vmatprep.subr.mxu0 0.0
      %590 = vmatpush1.msra.mxu0 0.0
      %591 = vmatprep.subr.mxu0 0.0
      %592 = vmatpush1.msra.mxu0 0.0
      %593 = vmatprep.subr.mxu0 0.0
      %594 = vmatpush1.msra.mxu0 0.0
      %595 = vmatprep.subr.mxu0 0.0
      %596 = vmatpush1.msra.mxu0 0.0
      %597 = vmatprep.subr.mxu0 0.0
      %598 = vmatpush1.msra.mxu0 0.0
      %599 = vmatprep.subr.mxu0 0.0
      %600 = vmatpush1.msra.mxu0 0.0
      %601 = vmatprep.mubr.f32.mxu0 0.0
      %602 = vmatmul.mubr.f32.gmra.mrb[0].mxu0 %v535
      %v603 = vpop.f32.mrb[0].mxu0
      %v604 = vadd.f32 0.0, %v603
      %v605 = vpop.f32.mrb[0].mxu0
      %606 = vdwg.mxu0
      %v607 = vld [vmem:[#allocation4] sm:$0xff]
      %v608 = vadd.f32 %v607, %v604
      %609 = vst [vmem:[#allocation4] sm:$0xff] %v608
      %v610 = vld [vmem:[#allocation4] sm:$0xff]
      %v611 = vld [vmem:[%s3] sm:$0xff]
      %613 = vset.pattern.permute.xlu0 0
      %614 = vperm.xlu0 %613, %v611
      %v615 = vpop.permute.xlu0 %614
      %v617 = vadd.f32 %v610, %v615
      %618 = vst [vmem:[%s262] sm:$0xff] %v617
      %p619 = scmp.lt.s32.totalorder %s19, 1
      %s620 = scalar_select %p619, %s19, 1
      %p621 = scmp.lt.s32.totalorder %s20, 1
      %s622 = scalar_select %p621, %s20, 1
      %s623 = smul.addr %s620, 2
      %s624 = sadd.s32 %s622, %s623
      %s625 = smul.addr %s624, 8
      %s626 = scalar_lea.vmem %s4, %s625
      // Predicated region
      $region37: #{conv_block_forward.1} parent=35 // pred_check
        %p627 = pneg %p145
      $region38: #{conv_block_forward.1} parent=35 // pred_check_branch
        %629 = sbr.rel (%p627) target = $region40
      $region39: #{conv_block_forward.1} parent=35 // pred_region
        _
      $region40: #{conv_block_forward.1} parent=35 // pred_fallthru
        _
    $region36: #{conv_block_forward.1} parent=5 // pred_fallthru
      _
    %p630 = scmp.le.s32.totalorder 2, %s10
    // Predicated region
    $region41: #{conv_block_forward.1} parent=5 // pred_check
      %p631 = pneg %p630
    $region42: #{conv_block_forward.1} parent=5 // pred_check_branch
      %633 = sbr.rel (%p631) target = $region44
    $region43: #{conv_block_forward.1} parent=5 // pred_region
      %s634 = ssub.s32 %s10, 2
      // Predicated region
      $region45: #{conv_block_forward.1} parent=43 // pred_check
        %p635 = pneg %p151
      $region46: #{conv_block_forward.1} parent=43 // pred_check_branch
        %637 = sbr.rel (%p635) target = $region48
      $region47: #{conv_block_forward.1} parent=43 // pred_region
        %p638 = scmp.lt.s32.totalorder %s21, 1
        %s639 = scalar_select %p638, %s21, 1
        %p640 = scmp.lt.s32.totalorder %s22, 1
        %s641 = scalar_select %p640, %s22, 1
        %s642 = smul.addr %s639, 2
        %s643 = sadd.s32 %s641, %s642
        %s644 = smul.addr %s643, 8
        %s645 = scalar_lea.vmem %s4, %s644
      $region48: #{conv_block_forward.1} parent=43 // pred_fallthru
        _
    $region44: #{conv_block_forward.1} parent=5 // pred_fallthru
      _
  $region6: #{conv_block_forward.1} parent=0 // loop_footer
    %s14 = sadd.s32 1, %s10
  $region7: #{conv_block_forward.1} parent=0 // loop_footer_branch
    %9 = sbr.rel target = $region3
  $region8: #{conv_block_forward.1} parent=0 // loop_exit
    _

</llo_original>
